<compile_context>
chip_gen: v7x
topology: tpu7x:2x2x1
jax: 0.10.0
libtpu: 0.0.40
codegen_flags: <defaults>
</compile_context>

<pallas_src>
import functools
import math

import jax
import jax.numpy as jnp
from jax.experimental import pallas as pl
from jax.experimental.pallas import tpu as pltpu


def _round_up(x, m):
    return ((x + m - 1) // m) * m


def _sine_layer_kernel(x_ref, wt_ref, b_ref, o_ref, acc_ref, *, omega_0):
    """Computes one (tm, tn) tile of sin(omega_0 * (x @ W^T + b)).

    Grid = (M_tiles, N_tiles, K_tiles); K (reduction) is the last axis and the
    f32 accumulator is resident across it.
    """
    @pl.when(pl.program_id(2) == 0)
    def _():
        acc_ref[...] = jnp.zeros_like(acc_ref)

    acc_ref[...] += jnp.dot(
        x_ref[...], wt_ref[...], preferred_element_type=jnp.float32
    )

    @pl.when(pl.program_id(2) == pl.num_programs(2) - 1)
    def _():
        z = acc_ref[...] + b_ref[...]                 # bias broadcast over rows
        o_ref[...] = jnp.sin(omega_0 * z).astype(o_ref.dtype)


def sine_layer_forward(x, weight, bias, omega_0=30.0, *, tm=256, tk=512, tn=256):
    """SineLayer forward: sin(omega_0 * (x @ weight.T + bias)).

    x:      [..., in_features]
    weight: [out_features, in_features]   (PyTorch nn.Linear layout)
    bias:   [out_features] or None
    """
    # TODO(synk): forward_with_intermediate (second output = pre-sin intermediate)
    # is not emitted as an extra kernel output; only forward() is implemented.
    orig_lead = x.shape[:-1]
    K = x.shape[-1]
    N, K_w = weight.shape
    assert K == K_w, (K, K_w)
    M = math.prod(orig_lead) if orig_lead else 1

    x2 = x.reshape(M, K)
    wt = jnp.transpose(weight)                         # [K, N] -> lane-dense output
    if bias is None:
        bias = jnp.zeros((N,), dtype=jnp.float32)
    b2 = bias.reshape(1, N).astype(jnp.float32)

    # Tile sizes: multiples of (8, 128), clipped to the padded problem size.
    tm = min(tm, _round_up(M, 8))
    tk = min(tk, _round_up(K, 128))
    tn = min(tn, _round_up(N, 128))
    Mp, Kp, Np = _round_up(M, tm), _round_up(K, tk), _round_up(N, tn)

    # Zero-pad in the wrapper: K-padding contributes nothing to the dot product;
    # padded M/N rows/cols are sliced off after the call.
    x2 = jnp.pad(x2, ((0, Mp - M), (0, Kp - K)))
    wt = jnp.pad(wt, ((0, Kp - K), (0, Np - N)))
    b2 = jnp.pad(b2, ((0, 0), (0, Np - N)))

    grid = (Mp // tm, Np // tn, Kp // tk)

    out = pl.pallas_call(
        functools.partial(_sine_layer_kernel, omega_0=float(omega_0)),
        out_shape=jax.ShapeDtypeStruct((Mp, Np), x.dtype),
        grid_spec=pltpu.PrefetchScalarGridSpec(
            num_scalar_prefetch=0,
            grid=grid,
            in_specs=[
                pl.BlockSpec((tm, tk), lambda i, j, k: (i, k)),   # x tile
                pl.BlockSpec((tk, tn), lambda i, j, k: (k, j)),   # W^T tile
                pl.BlockSpec((1, tn), lambda i, j, k: (0, j)),    # bias tile
            ],
            out_specs=pl.BlockSpec((tm, tn), lambda i, j, k: (i, j)),
            scratch_shapes=[pltpu.VMEM((tm, tn), jnp.float32)],
        ),
        compiler_params=pltpu.CompilerParams(
            dimension_semantics=("parallel", "parallel", "arbitrary"),
            vmem_limit_bytes=32 * 1024 * 1024,   # safe on v5e/v6e/v7x for these tiles
        ),
        cost_estimate=pl.CostEstimate(
            flops=2 * M * K * N,
            transcendentals=M * N,
            bytes_accessed=4 * (M * K + K * N + M * N),
        ),
    )(x2, wt, b2)

    return out[:M, :N].reshape(*orig_lead, N)


if __name__ == "__main__":
    key = jax.random.PRNGKey(0)
    k_x, k_w, k_b = jax.random.split(key, 3)

    # Small shapes consistent with the module: batch=2, seq=8, hidden=32.
    B, S, IN, OUT = 2, 8, 32, 32
    omega_0 = 30.0

    x = jax.random.normal(k_x, (B, S, IN), dtype=jnp.float32)

    # SIREN init, is_first=True:  W ~ U(-1/in, 1/in); nn.Linear default bias init.
    w_bound = 1.0 / IN
    weight = jax.random.uniform(k_w, (OUT, IN), jnp.float32, -w_bound, w_bound)
    b_bound = 1.0 / math.sqrt(IN)
    bias = jax.random.uniform(k_b, (OUT,), jnp.float32, -b_bound, b_bound)

    y = sine_layer_forward(x, weight, bias, omega_0=omega_0)
    y = jax.block_until_ready(y)

    # Pure-JAX reference (near-exact f32 matmul).
    ref = jnp.sin(
        omega_0
        * (jnp.einsum("bsi,oi->bso", x, weight,
                      precision=jax.lax.Precision.HIGHEST) + bias)
    )
    assert y.shape == (B, S, OUT), y.shape
    # omega_0=30 amplifies matmul rounding before sin(); tolerance covers any
    # MXU-pass precision difference between the kernel and the XLA reference.
    err = float(jnp.max(jnp.abs(y - ref)))
    assert jnp.allclose(y, ref, atol=5e-2, rtol=0.0), err

    print("KERNEL_OK")
</pallas_src>

<mosaic_0001>
module attributes {stable_mosaic.version = 11 : i64} {
  func.func @_sine_layer_kernel(%arg0: i32, %arg1: i32, %arg2: i32, %arg3: memref<16x128xf32, #tpu.memory_space<vmem>>, %arg4: memref<128x128xf32, #tpu.memory_space<vmem>>, %arg5: memref<1x128xf32, #tpu.memory_space<vmem>>, %arg6: memref<16x128xf32, #tpu.memory_space<vmem>>, %arg7: memref<16x128xf32, #tpu.memory_space<vmem>>) attributes {dimension_semantics = [#tpu.dimension_semantics<parallel>, #tpu.dimension_semantics<parallel>, #tpu.dimension_semantics<arbitrary>], iteration_bounds = array<i64: 1, 1, 1>, scalar_prefetch = 0 : i64, scratch_operands = 1 : i64, tpu.core_type = #tpu.core_type<tc>, window_params = [{transform_indices = @transform_0, window_bounds = array<i64: 16, 128>}, {transform_indices = @transform_1, window_bounds = array<i64: 128, 128>}, {transform_indices = @transform_2, window_bounds = array<i64: 1, 128>}, {transform_indices = @transform_3, window_bounds = array<i64: 16, 128>}]} {
    %c0_i32 = arith.constant 0 : i32
    %0 = arith.cmpi eq, %arg2, %c0_i32 : i32
    %1 = arith.extui %0 : i1 to i32
    %c0_i32_0 = arith.constant 0 : i32
    %2 = arith.cmpi ne, %1, %c0_i32_0 : i32
    scf.if %2 {
      %cst_10 = arith.constant 0.000000e+00 : f32
      %12 = vector.broadcast %cst_10 : f32 to vector<16x128xf32>
      %c0_11 = arith.constant 0 : index
      %c0_12 = arith.constant 0 : index
      %13 = vector.load %arg7[%c0_11, %c0_12] : memref<16x128xf32, #tpu.memory_space<vmem>>, vector<16x128xf32>
      tpu.vector_store %arg7[%c0_11, %c0_12], %12 {strides = array<i32>} : memref<16x128xf32, #tpu.memory_space<vmem>>, vector<16x128xf32>,
    } else {
    }
    %c0 = arith.constant 0 : index
    %c0_1 = arith.constant 0 : index
    %3 = vector.load %arg7[%c0, %c0_1] : memref<16x128xf32, #tpu.memory_space<vmem>>, vector<16x128xf32>
    %c0_2 = arith.constant 0 : index
    %c0_3 = arith.constant 0 : index
    %4 = vector.load %arg3[%c0_2, %c0_3] : memref<16x128xf32, #tpu.memory_space<vmem>>, vector<16x128xf32>
    %c0_4 = arith.constant 0 : index
    %c0_5 = arith.constant 0 : index
    %5 = vector.load %arg4[%c0_4, %c0_5] : memref<128x128xf32, #tpu.memory_space<vmem>>, vector<128x128xf32>
    %cst = arith.constant dense<0.000000e+00> : vector<16x128xf32>
    %6 = tpu.matmul %4, %5, %cst {dimension_numbers = #tpu.dot_dimension_numbers<[1], [0], [0], [1], [0, 0, 1, 1], [], []>} : vector<16x128xf32>, vector<128x128xf32>, vector<16x128xf32> -> vector<16x128xf32>
    %7 = arith.addf %3, %6 : vector<16x128xf32>
    %c0_6 = arith.constant 0 : index
    %c0_7 = arith.constant 0 : index
    %8 = vector.load %arg7[%c0_6, %c0_7] : memref<16x128xf32, #tpu.memory_space<vmem>>, vector<16x128xf32>
    tpu.vector_store %arg7[%c0_6, %c0_7], %7 {strides = array<i32>} : memref<16x128xf32, #tpu.memory_space<vmem>>, vector<16x128xf32>,
    %c0_i32_8 = arith.constant 0 : i32
    %9 = arith.cmpi eq, %arg2, %c0_i32_8 : i32
    %10 = arith.extui %9 : i1 to i32
    %c0_i32_9 = arith.constant 0 : i32
    %11 = arith.cmpi ne, %10, %c0_i32_9 : i32
    scf.if %11 {
      %c0_10 = arith.constant 0 : index
      %c0_11 = arith.constant 0 : index
      %12 = vector.load %arg7[%c0_10, %c0_11] : memref<16x128xf32, #tpu.memory_space<vmem>>, vector<16x128xf32>
      %c0_12 = arith.constant 0 : index
      %c0_13 = arith.constant 0 : index
      %13 = vector.load %arg5[%c0_12, %c0_13] : memref<1x128xf32, #tpu.memory_space<vmem>>, vector<1x128xf32>
      %14 = vector.broadcast %13 : vector<1x128xf32> to vector<16x128xf32>
      %15 = arith.addf %12, %14 : vector<16x128xf32>
      %cst_14 = arith.constant 3.000000e+01 : f32
      %16 = vector.broadcast %cst_14 : f32 to vector<16x128xf32>
      %17 = arith.mulf %16, %15 : vector<16x128xf32>
      %18 = math.sin %17 : vector<16x128xf32>
      %c0_15 = arith.constant 0 : index
      %c0_16 = arith.constant 0 : index
      %19 = vector.load %arg6[%c0_15, %c0_16] : memref<16x128xf32, #tpu.memory_space<vmem>>, vector<16x128xf32>
      tpu.vector_store %arg6[%c0_15, %c0_16], %18 {strides = array<i32>} : memref<16x128xf32, #tpu.memory_space<vmem>>, vector<16x128xf32>,
    } else {
    }
    return
  }
  func.func @transform_0(%arg0: i32, %arg1: i32, %arg2: i32) -> (i32, i32) {
    %c0_i32 = arith.constant 0 : i32
    return %arg0, %arg2 : i32, i32
  }
  func.func @transform_1(%arg0: i32, %arg1: i32, %arg2: i32) -> (i32, i32) {
    %c0_i32 = arith.constant 0 : i32
    return %arg2, %arg1 : i32, i32
  }
  func.func @transform_2(%arg0: i32, %arg1: i32, %arg2: i32) -> (i32, i32) {
    %c0_i32 = arith.constant 0 : i32
    %c0_i32_0 = arith.constant 0 : i32
    return %c0_i32, %arg1 : i32, i32
  }
  func.func @transform_3(%arg0: i32, %arg1: i32, %arg2: i32) -> (i32, i32) {
    %c0_i32 = arith.constant 0 : i32
    return %arg0, %arg1 : i32, i32
  }
}

</mosaic_0001>

<llo_original>
// kernel: tpu_custom_call.1
$region0: #{tpu_custom_call.1}
  #allocation0 [shape = 'u32[]', space=smem, size = 0x4, offset = 0x4, fixed_abs, tag = 'smem constant byte address 0x4 - core index']
  #allocation1 [shape = 'u32[144,128]{1,0:T(1,128)}', space=vmem, size = 0x12000, scoped, tag = 'internal scratch']
  #allocation2 [shape = 'f32[16,128]{1,0:T(8,128)}', space=vmem, size = 0x2000, scoped, tag = 'scratch operand']
  %s0 = inlined_call_operand.hbm [shape: f32[16,128], index: 0, kind: input, shape index: {}]
  %s1 = inlined_call_operand.hbm [shape: f32[128,128], index: 1, kind: input, shape index: {}]
  %s2 = inlined_call_operand.vmem [shape: f32[1,128], index: 2, kind: input, shape index: {}]
  %s3 = inlined_call_operand.hbm [shape: f32[16,128], index: 3, kind: output, shape index: {}]
  %s4 = sld [smem:[#allocation0]]
  $region38: #{tpu_custom_call.1} parent=0
    _
  %s6 = ssub.s32 1, %s4
  %s7 = scalar_select 0, %s6, %s4
  $region1: #{tpu_custom_call.1} parent=0
    #allocation3 [shape = 'u8[8192]{0}', space=vmem, size = 0x2000, scoped, tag = 'input window, operand 0, single buffered']
    #allocation4 [shape = 's32[1]{0}', space=sflag, size = 0x4, scoped, tag = 'scoped memory for tpu_custom_call.1']
    #allocation5 [shape = 's32[1]{0}', space=sflag, size = 0x4, scoped, tag = 'scoped memory for tpu_custom_call.1']
    #allocation6 [shape = 'u8[65536]{0}', space=vmem, size = 0x10000, scoped, tag = 'input window, operand 1, single buffered']
    #allocation7 [shape = 's32[1]{0}', space=sflag, size = 0x4, scoped, tag = 'scoped memory for tpu_custom_call.1']
    #allocation8 [shape = 'u8[8192]{0}', space=vmem, size = 0x2000, scoped, tag = 'output window, operand 0, single buffered']
    %8 = vsyncpa [#allocation4], 0
    %9 = vsyncpa [#allocation7], 0
    %10 = vsyncpa [#allocation5], 0
    // Predicated region
    $region2: #{tpu_custom_call.1} parent=1 // pred_check
      _
    $region3: #{tpu_custom_call.1} parent=1 // pred_check_branch
      %12 = sbr.rel (0) target = $region5
    $region4: #{tpu_custom_call.1} parent=1 // pred_region
      %s14 = ssub.s32 256, 256
      %15 = vsyncadd [#allocation4], %s14
      %s16 = sshll.u32 [#allocation3], 4
      %s17 = int_to_ptr.vmem [resolvable:$true] %s16
      %22 = dma.hbm_to_vmem [thread:$0]  %s0, 256, %s17, [#allocation4], 128, 128, 8
    $region5: #{tpu_custom_call.1} parent=1 // pred_fallthru
      _
    // Predicated region
    $region6: #{tpu_custom_call.1} parent=1 // pred_check
      _
    $region7: #{tpu_custom_call.1} parent=1 // pred_check_branch
      %24 = sbr.rel (0) target = $region9
    $region8: #{tpu_custom_call.1} parent=1 // pred_region
      %s26 = ssub.s32 2048, 2048
      %27 = vsyncadd [#allocation7], %s26
      %s28 = sshll.u32 [#allocation6], 4
      %s29 = int_to_ptr.vmem [resolvable:$true] %s28
      %34 = dma.hbm_to_vmem [thread:$0]  %s1, 2048, %s29, [#allocation7], 128, 128, 8
    $region9: #{tpu_custom_call.1} parent=1 // pred_fallthru
      _
    // Predicated region
    $region10: #{tpu_custom_call.1} parent=1 // pred_check
      _
    $region11: #{tpu_custom_call.1} parent=1 // pred_check_branch
      %36 = sbr.rel (0) target = $region13
    $region12: #{tpu_custom_call.1} parent=1 // pred_region
      _
    $region13: #{tpu_custom_call.1} parent=1 // pred_fallthru
      _
    // Predicated region
    $region14: #{tpu_custom_call.1} parent=1 // pred_check
      _
    $region15: #{tpu_custom_call.1} parent=1 // pred_check_branch
      %38 = sbr.rel (0) target = $region17
    $region16: #{tpu_custom_call.1} parent=1 // pred_region
      %39 = dma.done [#allocation4], 256
    $region17: #{tpu_custom_call.1} parent=1 // pred_fallthru
      _
    // Predicated region
    $region18: #{tpu_custom_call.1} parent=1 // pred_check
      _
    $region19: #{tpu_custom_call.1} parent=1 // pred_check_branch
      %41 = sbr.rel (0) target = $region21
    $region20: #{tpu_custom_call.1} parent=1 // pred_region
      %42 = dma.done [#allocation7], 2048
    $region21: #{tpu_custom_call.1} parent=1 // pred_fallthru
      _
    %p43 = scmp.eq.s32.totalorder 0, 0
    // Predicated region
    $region22: #{tpu_custom_call.1} parent=1 // pred_check
      %p44 = pneg %p43
    $region23: #{tpu_custom_call.1} parent=1 // pred_check_branch
      %46 = sbr.rel (%p44) target = $region25
    $region24: #{tpu_custom_call.1} parent=1 // pred_region
      %47 = vst [vmem:[#allocation2] sm:$0xff] 0.0
      %48 = vst [vmem:[#allocation2 + $0x8] sm:$0xff] 0.0
    $region25: #{tpu_custom_call.1} parent=1 // pred_fallthru
      _
    %v49 = vld [vmem:[#allocation2] sm:$0xff]
    %v50 = vld [vmem:[#allocation2 + $0x8] sm:$0xff]
    %v51 = vld [vmem:[#allocation3] sm:$0xff]
    %v52 = vld [vmem:[#allocation3 + $0x8] sm:$0xff]
    %v53 = vld [vmem:[#allocation6] sm:$0xff]
    %v54 = vld [vmem:[#allocation6 + $0x8] sm:$0xff]
    %v55 = vld [vmem:[#allocation6 + $0x10] sm:$0xff]
    %v56 = vld [vmem:[#allocation6 + $0x18] sm:$0xff]
    %v57 = vld [vmem:[#allocation6 + $0x20] sm:$0xff]
    %v58 = vld [vmem:[#allocation6 + $0x28] sm:$0xff]
    %v59 = vld [vmem:[#allocation6 + $0x30] sm:$0xff]
    %v60 = vld [vmem:[#allocation6 + $0x38] sm:$0xff]
    %v61 = vld [vmem:[#allocation6 + $0x40] sm:$0xff]
    %v62 = vld [vmem:[#allocation6 + $0x48] sm:$0xff]
    %v63 = vld [vmem:[#allocation6 + $0x50] sm:$0xff]
    %v64 = vld [vmem:[#allocation6 + $0x58] sm:$0xff]
    %v65 = vld [vmem:[#allocation6 + $0x60] sm:$0xff]
    %v66 = vld [vmem:[#allocation6 + $0x68] sm:$0xff]
    %v67 = vld [vmem:[#allocation6 + $0x70] sm:$0xff]
    %v68 = vld [vmem:[#allocation6 + $0x78] sm:$0xff]
    %69 = vmatprep.subr.mxu0 0.0
    %70 = vmatpush1.msra.mxu0 %v53
    %71 = vmatprep.subr.mxu0 0.0
    %72 = vmatpush1.msra.mxu0 %v54
    %73 = vmatprep.subr.mxu0 0.0
    %74 = vmatpush1.msra.mxu0 %v55
    %75 = vmatprep.subr.mxu0 0.0
    %76 = vmatpush1.msra.mxu0 %v56
    %77 = vmatprep.subr.mxu0 0.0
    %78 = vmatpush1.msra.mxu0 %v57
    %79 = vmatprep.subr.mxu0 0.0
    %80 = vmatpush1.msra.mxu0 %v58
    %81 = vmatprep.subr.mxu0 0.0
    %82 = vmatpush1.msra.mxu0 %v59
    %83 = vmatprep.subr.mxu0 0.0
    %84 = vmatpush1.msra.mxu0 %v60
    %85 = vmatprep.subr.mxu0 0.0
    %86 = vmatpush1.msra.mxu0 %v61
    %87 = vmatprep.subr.mxu0 0.0
    %88 = vmatpush1.msra.mxu0 %v62
    %89 = vmatprep.subr.mxu0 0.0
    %90 = vmatpush1.msra.mxu0 %v63
    %91 = vmatprep.subr.mxu0 0.0
    %92 = vmatpush1.msra.mxu0 %v64
    %93 = vmatprep.subr.mxu0 0.0
    %94 = vmatpush1.msra.mxu0 %v65
    %95 = vmatprep.subr.mxu0 0.0
    %96 = vmatpush1.msra.mxu0 %v66
    %97 = vmatprep.subr.mxu0 0.0
    %98 = vmatpush1.msra.mxu0 %v67
    %99 = vmatprep.subr.mxu0 0.0
    %100 = vmatpush1.msra.mxu0 %v68
    %101 = vmatprep.subr.mxu0 0.0
    %102 = vmatpush1.msra.mxu0 0.0
    %103 = vmatprep.subr.mxu0 0.0
    %104 = vmatpush1.msra.mxu0 0.0
    %105 = vmatprep.subr.mxu0 0.0
    %106 = vmatpush1.msra.mxu0 0.0
    %107 = vmatprep.subr.mxu0 0.0
    %108 = vmatpush1.msra.mxu0 0.0
    %109 = vmatprep.subr.mxu0 0.0
    %110 = vmatpush1.msra.mxu0 0.0
    %111 = vmatprep.subr.mxu0 0.0
    %112 = vmatpush1.msra.mxu0 0.0
    %113 = vmatprep.subr.mxu0 0.0
    %114 = vmatpush1.msra.mxu0 0.0
    %115 = vmatprep.subr.mxu0 0.0
    %116 = vmatpush1.msra.mxu0 0.0
    %117 = vmatprep.subr.mxu0 0.0
    %118 = vmatpush1.msra.mxu0 0.0
    %119 = vmatprep.subr.mxu0 0.0
    %120 = vmatpush1.msra.mxu0 0.0
    %121 = vmatprep.subr.mxu0 0.0
    %122 = vmatpush1.msra.mxu0 0.0
    %123 = vmatprep.subr.mxu0 0.0
    %124 = vmatpush1.msra.mxu0 0.0
    %125 = vmatprep.subr.mxu0 0.0
    %126 = vmatpush1.msra.mxu0 0.0
    %127 = vmatprep.subr.mxu0 0.0
    %128 = vmatpush1.msra.mxu0 0.0
    %129 = vmatprep.subr.mxu0 0.0
    %130 = vmatpush1.msra.mxu0 0.0
    %131 = vmatprep.subr.mxu0 0.0
    %132 = vmatpush1.msra.mxu0 0.0
    %133 = vmatprep.mubr.f32.mxu0 0.0
    %134 = vmatmul.mubr.f32.gmra.mrb[0].mxu0 %v51
    %v135 = vpop.f32.mrb[0].mxu0
    %v136 = vadd.f32 0.0, %v135
    %v137 = vpop.f32.mrb[0].mxu0
    %138 = vmatprep.mubr.f32.mxu0 0.0
    %139 = vmatmul.mubr.f32.gmra.mrb[0].mxu0 %v52
    %v140 = vpop.f32.mrb[0].mxu0
    %v141 = vadd.f32 0.0, %v140
    %v142 = vpop.f32.mrb[0].mxu0
    %143 = vdwg.mxu0
    %v144 = vadd.f32 %v49, %v136
    %v145 = vadd.f32 %v50, %v141
    %146 = vst [vmem:[#allocation2] sm:$0xff] %v144
    %147 = vst [vmem:[#allocation2 + $0x8] sm:$0xff] %v145
    // Predicated region
    $region26: #{tpu_custom_call.1} parent=1 // pred_check
      %p148 = pneg %p43
    $region27: #{tpu_custom_call.1} parent=1 // pred_check_branch
      %150 = sbr.rel (%p148) target = $region29
    $region28: #{tpu_custom_call.1} parent=1 // pred_region
      %v151 = vld [vmem:[#allocation2] sm:$0xff]
      %v152 = vld [vmem:[#allocation2 + $0x8] sm:$0xff]
      %v153 = vld [vmem:[%s2] sm:$0x1]
      %v155 = vlaneseq
      %v156 = vshrl.u32 %v155, 7
      %v157 = vsub.s32 0, %v156
      %v158 = vrot.slane %v153, %v157
      %v160 = vadd.f32 %v151, %v158
      %v161 = vadd.f32 %v152, %v158
      %v162 = vmul.f32 %v160, 30.0
      %v163 = vmul.f32 %v161, 30.0
      %v164 = vand.u32 2147483647, %v162
      %vm165 = vcmp.le.f32.partialorder %v164, 0.7853982
      %vm166 = vcmp.lt.s32.totalorder %v162, 0
      %v167 = vand.u32 %v162, 2139095040
      %v168 = vshrl.u32 %v167, 23
      %v169 = vsub.s32 %v168, 127
      %v170 = vand.u32 2147483647, %v162
      %v171 = vand.u32 %v170, 8388607
      %v172 = vor.u32 %v171, 8388608
      %v173 = vsub.s32 0, %v172
      %v174 = vadd.s32 %v169, 1
      %vm175 = vcmp.gt.s32.totalorder %v174, 0
      %v176 = vsel %vm175, %v174, 0
      %v177 = vshrl.u32 %v176, 5
      %v178 = vand.u32 %v176, 31
      %v179 = vsub.s32 32, %v178
      %v180 = vshrl.u32 683565275, %v179
      %v181 = vshll.u32 683565275, %v178
      %v182 = vshrl.u32 2475754826, %v179
      %v183 = vor.u32 %v181, %v182
      %v184 = vshll.u32 2475754826, %v178
      %v185 = vshrl.u32 2131351028, %v179
      %v186 = vor.u32 %v184, %v185
      %v187 = vshll.u32 2131351028, %v178
      %v188 = vshrl.u32 2102212464, %v179
      %v189 = vor.u32 %v187, %v188
      %v190 = vshll.u32 2102212464, %v178
      %v191 = vshrl.u32 920167782, %v179
      %v192 = vor.u32 %v190, %v191
      %v193 = vshll.u32 920167782, %v178
      %v194 = vshrl.u32 1326507024, %v179
      %v195 = vor.u32 %v193, %v194
      %vm196 = vcmp.lt.s32.totalorder %v177, 1
      %vm197 = vcmp.lt.s32.totalorder %v177, 2
      %vm198 = vcmp.lt.s32.totalorder %v177, 3
      %vm199 = vcmp.lt.s32.totalorder %v177, 4
      %v200 = vsel %vm196, %v180, %v183
      %v201 = vsel %vm199, %v189, 2102212464
      %v202 = vsel %vm198, %v186, %v201
      %v203 = vsel %vm197, %v200, %v202
      %v204 = vsel %vm196, %v183, %v186
      %v205 = vsel %vm199, %v192, 920167782
      %v206 = vsel %vm198, %v189, %v205
      %v207 = vsel %vm197, %v204, %v206
      %v208 = vsel %vm196, %v186, %v189
      %v209 = vsel %vm199, %v195, 1326507024
      %v210 = vsel %vm198, %v192, %v209
      %v211 = vsel %vm197, %v208, %v210
      %v212 = vshll.u32 %v172, 8
      %v213 = vmul.u32.u64.compose %v212, %v211
      %v214 = vextract.low.u32 %v213
      %v215 = vextract.high.u32 %v213
      %v216 = vmul.u32.u64.compose %v212, %v207
      %v217 = vextract.low.u32 %v216
      %v218 = vextract.high.u32 %v216
      %v219 = vmul.u32 %v212, %v203
      %v220 = vadd.s32 %v215, %v217
      %vm221 = vc.u32 %v215, %v217
      %v222 = vadd.s32 %v218, 1
      %v223 = vsel %vm221, %v222, %v218
      %v224 = vadd.s32 %v219, %v223
      %v225 = vadd.s32 %v224, 536870912
      %v226 = vshrl.u32 %v225, 30
      %v227 = vshll.u32 %v226, 30
      %v228 = vsub.s32 %v224, %v227
      %vm229 = vcmp.lt.s32.totalorder %v228, 0
      %v230 = vsub.s32 0, %v228
      %v231 = vsel %vm229, %v230, %v228
      %v232 = vclz %v231
      %v233 = vsub.s32 %v232, 2
      %vm234 = vcmp.gt.s32.totalorder 0, %v233
      %v235 = vsel %vm234, 0, %v233
      %v236 = vsub.s32 32, %v235
      %v237 = vshll.u32 %v228, %v235
      %v238 = vshrl.u32 %v220, %v236
      %v239 = vor.u32 %v237, %v238
      %v240 = vsub.s32 4294967266, %v235
      %v241 = vadd.s32 %v240, 127
      %v242 = vshll.u32 %v241, 23
      %v243 = vor.u32 4788187, %v242
      %v244 = vand.u32 2147483647, %v243
      %v246 = vcvt.s32.f32 %v239
      %v247 = vmul.f32 %v246, %v244
      %v248 = vxor.u32 %v247, 2147483648
      %v249 = vsel %vm166, %v248, %v247
      %v250 = vsub.s32 4, %v226
      %v251 = vsel %vm166, %v250, %v226
      %v252 = vsel %vm165, %v162, %v249
      %v253 = vsel %vm165, 0, %v251
      %v254 = vcosq.f32.pop %v252
      %v255 = vsinq.f32.pop %v252
      %vm256 = vweird.f32 %v162
      %v257 = vadd.s32 %v253, 3
      %v258 = vand.u32 %v257, 3
      %vm259 = vcmp.lt.s32.totalorder %v258, 2
      %vm260 = vcmp.eq.s32.totalorder %v258, 0
      %v261 = vxor.u32 %v255, 2147483648
      %v262 = vsel %vm260, %v254, %v261
      %vm263 = vcmp.eq.s32.totalorder %v258, 2
      %v264 = vxor.u32 %v254, 2147483648
      %v265 = vsel %vm263, %v264, %v255
      %v266 = vsel %vm259, %v262, %v265
      %v267 = vsel %vm256, nan, %v266
      %v268 = vand.u32 2147483647, %v163
      %vm269 = vcmp.le.f32.partialorder %v268, 0.7853982
      %vm270 = vcmp.lt.s32.totalorder %v163, 0
      %v271 = vand.u32 %v163, 2139095040
      %v272 = vshrl.u32 %v271, 23
      %v273 = vsub.s32 %v272, 127
      %v274 = vand.u32 2147483647, %v163
      %v275 = vand.u32 %v274, 8388607
      %v276 = vor.u32 %v275, 8388608
      %v277 = vsub.s32 0, %v276
      %v278 = vadd.s32 %v273, 1
      %vm279 = vcmp.gt.s32.totalorder %v278, 0
      %v280 = vsel %vm279, %v278, 0
      %v281 = vshrl.u32 %v280, 5
      %v282 = vand.u32 %v280, 31
      %v283 = vsub.s32 32, %v282
      %v284 = vshrl.u32 683565275, %v283
      %v285 = vshll.u32 683565275, %v282
      %v286 = vshrl.u32 2475754826, %v283
      %v287 = vor.u32 %v285, %v286
      %v288 = vshll.u32 2475754826, %v282
      %v289 = vshrl.u32 2131351028, %v283
      %v290 = vor.u32 %v288, %v289
      %v291 = vshll.u32 2131351028, %v282
      %v292 = vshrl.u32 2102212464, %v283
      %v293 = vor.u32 %v291, %v292
      %v294 = vshll.u32 2102212464, %v282
      %v295 = vshrl.u32 920167782, %v283
      %v296 = vor.u32 %v294, %v295
      %v297 = vshll.u32 920167782, %v282
      %v298 = vshrl.u32 1326507024, %v283
      %v299 = vor.u32 %v297, %v298
      %vm300 = vcmp.lt.s32.totalorder %v281, 1
      %vm301 = vcmp.lt.s32.totalorder %v281, 2
      %vm302 = vcmp.lt.s32.totalorder %v281, 3
      %vm303 = vcmp.lt.s32.totalorder %v281, 4
      %v304 = vsel %vm300, %v284, %v287
      %v305 = vsel %vm303, %v293, 2102212464
      %v306 = vsel %vm302, %v290, %v305
      %v307 = vsel %vm301, %v304, %v306
      %v308 = vsel %vm300, %v287, %v290
      %v309 = vsel %vm303, %v296, 920167782
      %v310 = vsel %vm302, %v293, %v309
      %v311 = vsel %vm301, %v308, %v310
      %v312 = vsel %vm300, %v290, %v293
      %v313 = vsel %vm303, %v299, 1326507024
      %v314 = vsel %vm302, %v296, %v313
      %v315 = vsel %vm301, %v312, %v314
      %v316 = vshll.u32 %v276, 8
      %v317 = vmul.u32.u64.compose %v316, %v315
      %v318 = vextract.low.u32 %v317
      %v319 = vextract.high.u32 %v317
      %v320 = vmul.u32.u64.compose %v316, %v311
      %v321 = vextract.low.u32 %v320
      %v322 = vextract.high.u32 %v320
      %v323 = vmul.u32 %v316, %v307
      %v324 = vadd.s32 %v319, %v321
      %vm325 = vc.u32 %v319, %v321
      %v326 = vadd.s32 %v322, 1
      %v327 = vsel %vm325, %v326, %v322
      %v328 = vadd.s32 %v323, %v327
      %v329 = vadd.s32 %v328, 536870912
      %v330 = vshrl.u32 %v329, 30
      %v331 = vshll.u32 %v330, 30
      %v332 = vsub.s32 %v328, %v331
      %vm333 = vcmp.lt.s32.totalorder %v332, 0
      %v334 = vsub.s32 0, %v332
      %v335 = vsel %vm333, %v334, %v332
      %v336 = vclz %v335
      %v337 = vsub.s32 %v336, 2
      %vm338 = vcmp.gt.s32.totalorder 0, %v337
      %v339 = vsel %vm338, 0, %v337
      %v340 = vsub.s32 32, %v339
      %v341 = vshll.u32 %v332, %v339
      %v342 = vshrl.u32 %v324, %v340
      %v343 = vor.u32 %v341, %v342
      %v344 = vsub.s32 4294967266, %v339
      %v345 = vadd.s32 %v344, 127
      %v346 = vshll.u32 %v345, 23
      %v347 = vor.u32 4788187, %v346
      %v348 = vand.u32 2147483647, %v347
      %v350 = vcvt.s32.f32 %v343
      %v351 = vmul.f32 %v350, %v348
      %v352 = vxor.u32 %v351, 2147483648
      %v353 = vsel %vm270, %v352, %v351
      %v354 = vsub.s32 4, %v330
      %v355 = vsel %vm270, %v354, %v330
      %v356 = vsel %vm269, %v163, %v353
      %v357 = vsel %vm269, 0, %v355
      %v358 = vcosq.f32.pop %v356
      %v359 = vsinq.f32.pop %v356
      %vm360 = vweird.f32 %v163
      %v361 = vadd.s32 %v357, 3
      %v362 = vand.u32 %v361, 3
      %vm363 = vcmp.lt.s32.totalorder %v362, 2
      %vm364 = vcmp.eq.s32.totalorder %v362, 0
      %v365 = vxor.u32 %v359, 2147483648
      %v366 = vsel %vm364, %v358, %v365
      %vm367 = vcmp.eq.s32.totalorder %v362, 2
      %v368 = vxor.u32 %v358, 2147483648
      %v369 = vsel %vm367, %v368, %v359
      %v370 = vsel %vm363, %v366, %v369
      %v371 = vsel %vm360, nan, %v370
      %372 = vst [vmem:[#allocation8] sm:$0xff] %v267
      %373 = vst [vmem:[#allocation8 + $0x8] sm:$0xff] %v371
    $region29: #{tpu_custom_call.1} parent=1 // pred_fallthru
      _
    // Predicated region
    $region30: #{tpu_custom_call.1} parent=1 // pred_check
      _
    $region31: #{tpu_custom_call.1} parent=1 // pred_check_branch
      %375 = sbr.rel (0) target = $region33
    $region32: #{tpu_custom_call.1} parent=1 // pred_region
      %s377 = ssub.s32 256, 256
      %378 = vsyncadd [#allocation5], %s377
      %s379 = sshll.u32 [#allocation8], 4
      %s380 = int_to_ptr.vmem [resolvable:$true] %s379
      %385 = dma.vmem_to_hbm [thread:$0]  %s380, 256, %s3, [#allocation5], 128, 128, 8
    $region33: #{tpu_custom_call.1} parent=1 // pred_fallthru
      _
    // Predicated region
    $region34: #{tpu_custom_call.1} parent=1 // pred_check
      _
    $region35: #{tpu_custom_call.1} parent=1 // pred_check_branch
      %387 = sbr.rel (0) target = $region37
    $region36: #{tpu_custom_call.1} parent=1 // pred_region
      %388 = dma.done [#allocation5], 256
    $region37: #{tpu_custom_call.1} parent=1 // pred_fallthru
      _
    %389 = vsyncpa [#allocation4], 1
    %390 = vsyncpa [#allocation7], 1
    %391 = vsyncpa [#allocation5], 1

</llo_original>
